<compile_context>
chip_gen: v7x
topology: tpu7x:2x2x1
jax: 0.10.0
libtpu: 0.0.40
codegen_flags: <defaults>
</compile_context>

<pallas_src>
import functools

import jax
import jax.numpy as jnp
from jax.experimental import pallas as pl
from jax.experimental.pallas import tpu as pltpu


def _vmem_capacity_bytes():
    """Physical per-TensorCore VMEM, with a conservative fallback (v7x = 64 MiB)."""
    try:
        info = pltpu.get_tpu_info()
        cap = getattr(info, "vmem_capacity_bytes", None)
        if cap:
            return int(cap)
    except Exception:
        pass
    return 64 << 20


def _self_supervise_kernel(xT_ref, yT_ref, w_ref, b_ref, part_ref, acc,
                           *, m_total, tm, tiles_per_split, binary):
    c = pl.program_id(0)          # M-split index ("parallel"; 2 TCs on v7x)
    i = pl.program_id(1)          # tile index within this split ("arbitrary")

    @pl.when(i == 0)
    def _init():
        acc[...] = jnp.zeros_like(acc)

    x = xT_ref[...]                           # (nin,  tm), source dtype (f32/bf16)
    y = yT_ref[...].astype(jnp.float32)       # (nout, tm)
    w = w_ref[...]                            # (nout, nin), pre-cast to x.dtype
    b = b_ref[...]                            # (nout, 1),  pre-cast to f32

    # logits^T = W @ x^T + b : (nout, tm), lane-dense along the sample axis.
    z = jnp.dot(w, x, preferred_element_type=jnp.float32) + b

    if binary:
        # numerically stable softplus pieces for BCEWithLogits:
        #   softplus(z)  = max(z,0) + log1p(exp(-|z|)),  softplus(-z) = softplus(z) - z
        sp_pos = jnp.maximum(z, 0.0) + jnp.log1p(jnp.exp(-jnp.abs(z)))
        sp_neg = sp_pos - z
        terms = (y * sp_neg,                  # pos_weight applied in the wrapper
                 (1.0 - y) * sp_pos)
    else:
        d = z - y
        terms = (d * d,)

    def _accum_full():
        for k, t in enumerate(terms):
            acc[k] += t                       # elementwise VPU adds, no per-step reduce

    ragged = (m_total % tm) != 0              # static
    if ragged:
        last_tile = (m_total + tm - 1) // tm - 1            # static
        is_tail = (c * tiles_per_split + i) == last_tile    # traced

        # Masked path only on the single ragged tile.  Padding columns of the
        # last block carry undefined data, so they are removed with a select
        # (NOT a multiply-by-mask) which also kills any NaN/Inf they produce.
        @pl.when(is_tail)
        def _accum_tail():
            col = last_tile * tm + jax.lax.broadcasted_iota(jnp.int32, z.shape, 1)
            valid = col < m_total
            for k, t in enumerate(terms):
                acc[k] += jnp.where(valid, t, 0.0)

        @pl.when(jnp.logical_not(is_tail))
        def _accum_body():
            _accum_full()
    else:
        _accum_full()

    @pl.when(i == pl.num_programs(1) - 1)
    def _finalize():
        # Per-split partial sums -> lane-dense (1, 8, 128) output block:
        # sublane 0 carries sum(term0), sublane 1 carries sum(term1).
        s0 = jnp.sum(acc[0])
        s1 = jnp.sum(acc[1]) if binary else jnp.float32(0.0)
        sub = jax.lax.broadcasted_iota(jnp.int32, part_ref.shape, 1)
        part_ref[...] = jnp.where(sub == 0, s0, jnp.where(sub == 1, s1, 0.0))


def self_supervise_loss(y_hat, y, weight, bias, idxs, *, binary=True, tm=None,
                        compute_dtype=None):
    """Pallas equivalent of SelfSupervise.forward (idxs supplied explicitly).

    weight is in torch.nn.Linear layout: (nout, nin); bias: (nout,).
    compute_dtype=jnp.bfloat16 optionally down-casts the activations (and W)
    to halve HBM traffic; kernel math / accumulation stays in float32.
    """
    # ---- glue (plain XLA): flatten(0,-3), subsample gather, one-step time
    # shift, and a transpose so the flattened sample axis lands on lanes. ----
    y_hat = y_hat.reshape((-1,) + y_hat.shape[-2:])
    y = y.reshape((-1,) + y.shape[-2:])
    xh = y_hat[idxs, :-1, :]                 # (S, T-1, nin)
    yt = y[idxs, 1:, :]                      # (S, T-1, nout)
    S, tm1, nin = xh.shape
    nout = yt.shape[-1]
    M = S * tm1

    if compute_dtype is not None:
        xh = xh.astype(compute_dtype)

    xT = xh.reshape(M, nin).T                # (nin,  M), lane-dense samples
    yT = yt.reshape(M, nout).T               # (nout, M)

    # sum(y) for pos_weight is a cheap reduction that fuses with the gather
    # pass; it replaces the third in-kernel accumulator plane.
    s_y = jnp.sum(yt, dtype=jnp.float32) if binary else None

    w2d = weight.astype(xT.dtype)            # hoisted grid-invariant cast
    b2d = bias.astype(jnp.float32).reshape(nout, 1)

    n_acc = 2 if binary else 1
    xbytes = jnp.dtype(xT.dtype).itemsize
    ybytes = jnp.dtype(yT.dtype).itemsize

    # ---- generation-aware tile sizing -------------------------------------
    phys_vmem = _vmem_capacity_bytes()               # 128 MiB v5e/v6e, 64 MiB v7x
    budget = min(phys_vmem // 2, 48 << 20)           # tiles+acc stay under ~half VMEM
    per_col = 2 * (nin * xbytes + nout * ybytes) + n_acc * nout * 4
    tm_budget = min(65536, max(512, (budget // per_col) // 128 * 128))

    if tm is None:
        tm = tm_budget
    if M <= tm:                                       # single block covering all of M
        tm = M
        n_tiles = 1
    else:
        tm = max(128, (tm // 128) * 128)
        n_tiles = -(-M // tm)

    # 2-way split of M across TensorCores (v7x); enabled only when the tile
    # count divides evenly so no clamped / out-of-range blocks are needed.
    num_splits = 2 if (n_tiles >= 2 and n_tiles % 2 == 0) else 1
    tiles_per_split = n_tiles // num_splits

    # Raise the scoped-VMEM limit explicitly (v5e default is only 16 MiB) while
    # leaving headroom below physical capacity (matters on v7x's 64 MiB).
    vmem_limit = max(32 << 20, min(phys_vmem, 128 << 20) - (16 << 20))

    kernel = functools.partial(_self_supervise_kernel, m_total=M, tm=tm,
                               tiles_per_split=tiles_per_split, binary=binary)

    partials = pl.pallas_call(
        kernel,
        out_shape=jax.ShapeDtypeStruct((num_splits, 8, 128), jnp.float32),
        grid_spec=pltpu.PrefetchScalarGridSpec(
            num_scalar_prefetch=0,
            grid=(num_splits, tiles_per_split),
            in_specs=[
                pl.BlockSpec((nin, tm), lambda c, i: (0, c * tiles_per_split + i)),
                pl.BlockSpec((nout, tm), lambda c, i: (0, c * tiles_per_split + i)),
                pl.BlockSpec((nout, nin), lambda c, i: (0, 0)),
                pl.BlockSpec((nout, 1), lambda c, i: (0, 0)),
            ],
            out_specs=pl.BlockSpec((1, 8, 128), lambda c, i: (c, 0, 0)),
            scratch_shapes=[pltpu.VMEM((n_acc, nout, tm), jnp.float32)],
        ),
        compiler_params=pltpu.CompilerParams(
            dimension_semantics=("parallel", "arbitrary"),
            vmem_limit_bytes=int(vmem_limit)),
    )(xT, yT, w2d, b2d)

    # ---- combine per-split partials (wrapper-side scalar math) ------------
    count = jnp.float32(M * nout)
    if binary:
        s_pos = jnp.sum(partials[:, 0, 0])
        s_neg = jnp.sum(partials[:, 1, 0])
        pos_w = count / s_y                  # == y.mean() ** -1
        return (pos_w * s_pos + s_neg) / count
    else:
        return jnp.sum(partials[:, 0, 0]) / count


if __name__ == "__main__":
    key = jax.random.PRNGKey(0)
    ks = jax.random.split(key, 10)

    def reference(y_hat, y, W, b, idxs, binary):
        yh = y_hat.reshape((-1,) + y_hat.shape[-2:])[idxs, :-1, :]
        yt = y.reshape((-1,) + y.shape[-2:])[idxs, 1:, :]
        logits = jnp.einsum("stn,on->sto", yh, W) + b
        if binary:
            pos_w = 1.0 / jnp.mean(yt)
            return jnp.mean(pos_w * yt * jnp.logaddexp(0.0, -logits)
                            + (1.0 - yt) * jnp.logaddexp(0.0, logits))
        return jnp.mean((logits - yt) ** 2)

    # ---- Case A: small shapes, single block, BCE + MSE ---------------------
    N, T, nin, nout, S = 16, 8, 32, 8, 8
    y_hat = jax.random.normal(ks[0], (N, T, nin), jnp.float32)
    y = jax.random.bernoulli(ks[1], 0.5, (N, T, nout)).astype(jnp.float32)
    bound = 1.0 / (nin ** 0.5)
    W = jax.random.uniform(ks[2], (nout, nin), jnp.float32, -bound, bound)
    b = jax.random.uniform(ks[3], (nout,), jnp.float32, -bound, bound)
    idxs = jax.random.randint(ks[4], (S,), 0, N)   # torch.randint stand-in

    bce = jax.block_until_ready(
        jax.jit(functools.partial(self_supervise_loss, binary=True))(y_hat, y, W, b, idxs))
    mse = jax.block_until_ready(
        jax.jit(functools.partial(self_supervise_loss, binary=False))(y_hat, y, W, b, idxs))
    assert jnp.allclose(bce, reference(y_hat, y, W, b, idxs, True), rtol=2e-3, atol=2e-3)
    assert jnp.allclose(mse, reference(y_hat, y, W, b, idxs, False), rtol=2e-3, atol=2e-3)

    # ---- Case B: multi-tile, even tile count (2-way split) + ragged tail ---
    N2, T2, nin2, nout2, S2 = 24, 101, 40, 12, 10   # M = 10*100 = 1000
    y_hat2 = jax.random.normal(ks[5], (N2, T2, nin2), jnp.float32)
    y2 = jax.random.bernoulli(ks[6], 0.5, (N2, T2, nout2)).astype(jnp.float32)
    bound2 = 1.0 / (nin2 ** 0.5)
    W2 = jax.random.uniform(ks[7], (nout2, nin2), jnp.float32, -bound2, bound2)
    b2 = jax.random.uniform(ks[8], (nout2,), jnp.float32, -bound2, bound2)
    idxs2 = jax.random.randint(ks[9], (S2,), 0, N2)

    bce2 = jax.block_until_ready(
        jax.jit(functools.partial(self_supervise_loss, binary=True, tm=256))(
            y_hat2, y2, W2, b2, idxs2))             # 4 tiles -> split=2, ragged tail
    assert jnp.allclose(bce2, reference(y_hat2, y2, W2, b2, idxs2, True),
                        rtol=2e-3, atol=2e-3)

    mse2 = jax.block_until_ready(
        jax.jit(functools.partial(self_supervise_loss, binary=False, tm=384))(
            y_hat2, y2, W2, b2, idxs2))             # 3 tiles -> split=1, ragged tail
    assert jnp.allclose(mse2, reference(y_hat2, y2, W2, b2, idxs2, False),
                        rtol=2e-3, atol=2e-3)

    # ---- Case C: bf16 activations (halved HBM traffic), loose tolerance ----
    bce_bf16 = jax.block_until_ready(
        jax.jit(functools.partial(self_supervise_loss, binary=True,
                                  compute_dtype=jnp.bfloat16))(y_hat, y, W, b, idxs))
    assert jnp.allclose(bce_bf16, reference(y_hat, y, W, b, idxs, True),
                        rtol=5e-2, atol=5e-2)

    print("KERNEL_OK")
</pallas_src>

<mosaic_0001>
module attributes {stable_mosaic.version = 11 : i64} {
  func.func @_self_supervise_kernel(%arg0: i32, %arg1: i32, %arg2: memref<32x56xf32, #tpu.memory_space<vmem>>, %arg3: memref<8x56xf32, #tpu.memory_space<vmem>>, %arg4: memref<8x32xf32, #tpu.memory_space<vmem>>, %arg5: memref<8x1xf32, #tpu.memory_space<vmem>>, %arg6: memref<1x8x128xf32, #tpu.memory_space<vmem>>, %arg7: memref<2x8x56xf32, #tpu.memory_space<vmem>>) attributes {dimension_semantics = [#tpu.dimension_semantics<parallel>, #tpu.dimension_semantics<arbitrary>], iteration_bounds = array<i64: 1, 1>, scalar_prefetch = 0 : i64, scratch_operands = 1 : i64, tpu.core_type = #tpu.core_type<tc>, window_params = [{transform_indices = @transform_0, window_bounds = array<i64: 32, 56>}, {transform_indices = @transform_1, window_bounds = array<i64: 8, 56>}, {pipeline_mode = #tpu.pipeline_mode<synchronous>, transform_indices = @transform_2, window_bounds = array<i64: 8, 32>}, {pipeline_mode = #tpu.pipeline_mode<synchronous>, transform_indices = @transform_3, window_bounds = array<i64: 8, 1>}, {transform_indices = @transform_4, window_bounds = array<i64: 1, 8, 128>}]} {
    %c0_i32 = arith.constant 0 : i32
    %0 = arith.cmpi eq, %arg1, %c0_i32 : i32
    %1 = arith.extui %0 : i1 to i32
    %c0_i32_0 = arith.constant 0 : i32
    %2 = arith.cmpi ne, %1, %c0_i32_0 : i32
    scf.if %2 {
      %cst_24 = arith.constant 0.000000e+00 : f32
      %38 = vector.broadcast %cst_24 : f32 to vector<2x8x56xf32>
      %c0_25 = arith.constant 0 : index
      %c0_26 = arith.constant 0 : index
      %c0_27 = arith.constant 0 : index
      %39 = vector.load %arg7[%c0_25, %c0_26, %c0_27] : memref<2x8x56xf32, #tpu.memory_space<vmem>>, vector<2x8x56xf32>
      tpu.vector_store %arg7[%c0_25, %c0_26, %c0_27], %38 {strides = array<i32>} : memref<2x8x56xf32, #tpu.memory_space<vmem>>, vector<2x8x56xf32>,
    } else {
    }
    %c0 = arith.constant 0 : index
    %c0_1 = arith.constant 0 : index
    %3 = vector.load %arg2[%c0, %c0_1] : memref<32x56xf32, #tpu.memory_space<vmem>>, vector<32x56xf32>
    %c0_2 = arith.constant 0 : index
    %c0_3 = arith.constant 0 : index
    %4 = vector.load %arg3[%c0_2, %c0_3] : memref<8x56xf32, #tpu.memory_space<vmem>>, vector<8x56xf32>
    %c0_4 = arith.constant 0 : index
    %c0_5 = arith.constant 0 : index
    %5 = vector.load %arg4[%c0_4, %c0_5] : memref<8x32xf32, #tpu.memory_space<vmem>>, vector<8x32xf32>
    %c0_6 = arith.constant 0 : index
    %c0_7 = arith.constant 0 : index
    %6 = vector.load %arg5[%c0_6, %c0_7] : memref<8x1xf32, #tpu.memory_space<vmem>>, vector<8x1xf32>
    %cst = arith.constant dense<0.000000e+00> : vector<8x56xf32>
    %7 = tpu.matmul %5, %3, %cst {dimension_numbers = #tpu.dot_dimension_numbers<[1], [0], [0], [1], [0, 0, 1, 1], [], []>} : vector<8x32xf32>, vector<32x56xf32>, vector<8x56xf32> -> vector<8x56xf32>
    %8 = vector.broadcast %6 : vector<8x1xf32> to vector<8x56xf32>
    %9 = arith.addf %7, %8 : vector<8x56xf32>
    %cst_8 = arith.constant 0.000000e+00 : f32
    %10 = vector.broadcast %cst_8 : f32 to vector<8x56xf32>
    %11 = arith.maximumf %9, %10 : vector<8x56xf32>
    %12 = math.absf %9 : vector<8x56xf32>
    %cst_9 = arith.constant 0.000000e+00 : f32
    %13 = vector.broadcast %cst_9 : f32 to vector<8x56xf32>
    %14 = arith.subf %13, %12 : vector<8x56xf32>
    %15 = math.exp %14 : vector<8x56xf32>
    %16 = math.log1p %15 : vector<8x56xf32>
    %17 = arith.addf %11, %16 : vector<8x56xf32>
    %18 = arith.subf %17, %9 : vector<8x56xf32>
    %19 = arith.mulf %4, %18 : vector<8x56xf32>
    %cst_10 = arith.constant 1.000000e+00 : f32
    %20 = vector.broadcast %cst_10 : f32 to vector<8x56xf32>
    %21 = arith.subf %20, %4 : vector<8x56xf32>
    %22 = arith.mulf %21, %17 : vector<8x56xf32>
    %c0_11 = arith.constant 0 : index
    %c0_12 = arith.constant 0 : index
    %c0_13 = arith.constant 0 : index
    %23 = vector.load %arg7[%c0_11, %c0_12, %c0_13] : memref<2x8x56xf32, #tpu.memory_space<vmem>>, vector<1x8x56xf32>
    %24 = vector.shape_cast %23 : vector<1x8x56xf32> to vector<8x56xf32>
    %25 = arith.addf %24, %19 : vector<8x56xf32>
    %c0_14 = arith.constant 0 : index
    %c0_15 = arith.constant 0 : index
    %c0_16 = arith.constant 0 : index
    %26 = vector.load %arg7[%c0_14, %c0_15, %c0_16] : memref<2x8x56xf32, #tpu.memory_space<vmem>>, vector<1x8x56xf32>
    %27 = vector.shape_cast %26 : vector<1x8x56xf32> to vector<8x56xf32>
    %28 = vector.shape_cast %25 : vector<8x56xf32> to vector<1x8x56xf32>
    tpu.vector_store %arg7[%c0_14, %c0_15, %c0_16], %28 {strides = array<i32>} : memref<2x8x56xf32, #tpu.memory_space<vmem>>, vector<1x8x56xf32>,
    %c1 = arith.constant 1 : index
    %c0_17 = arith.constant 0 : index
    %c0_18 = arith.constant 0 : index
    %29 = vector.load %arg7[%c1, %c0_17, %c0_18] : memref<2x8x56xf32, #tpu.memory_space<vmem>>, vector<1x8x56xf32>
    %30 = vector.shape_cast %29 : vector<1x8x56xf32> to vector<8x56xf32>
    %31 = arith.addf %30, %22 : vector<8x56xf32>
    %c1_19 = arith.constant 1 : index
    %c0_20 = arith.constant 0 : index
    %c0_21 = arith.constant 0 : index
    %32 = vector.load %arg7[%c1_19, %c0_20, %c0_21] : memref<2x8x56xf32, #tpu.memory_space<vmem>>, vector<1x8x56xf32>
    %33 = vector.shape_cast %32 : vector<1x8x56xf32> to vector<8x56xf32>
    %34 = vector.shape_cast %31 : vector<8x56xf32> to vector<1x8x56xf32>
    tpu.vector_store %arg7[%c1_19, %c0_20, %c0_21], %34 {strides = array<i32>} : memref<2x8x56xf32, #tpu.memory_space<vmem>>, vector<1x8x56xf32>,
    %c0_i32_22 = arith.constant 0 : i32
    %35 = arith.cmpi eq, %arg1, %c0_i32_22 : i32
    %36 = arith.extui %35 : i1 to i32
    %c0_i32_23 = arith.constant 0 : i32
    %37 = arith.cmpi ne, %36, %c0_i32_23 : i32
    scf.if %37 {
      %c0_24 = arith.constant 0 : index
      %c0_25 = arith.constant 0 : index
      %c0_26 = arith.constant 0 : index
      %38 = vector.load %arg7[%c0_24, %c0_25, %c0_26] : memref<2x8x56xf32, #tpu.memory_space<vmem>>, vector<1x8x56xf32>
      %39 = vector.shape_cast %38 : vector<1x8x56xf32> to vector<8x56xf32>
      %40 = vector.shape_cast %39 : vector<8x56xf32> to vector<1x8x56xf32>
      %cst_27 = arith.constant dense<0.000000e+00> : vector<1xf32>
      %41 = vector.multi_reduction <add>, %40, %cst_27 [1, 2] : vector<1x8x56xf32> to vector<1xf32>
      %42 = vector.shape_cast %41 : vector<1xf32> to vector<1x1x1xf32>
      %43 = vector.extract %42[0, 0, 0] : f32 from vector<1x1x1xf32>
      %c1_28 = arith.constant 1 : index
      %c0_29 = arith.constant 0 : index
      %c0_30 = arith.constant 0 : index
      %44 = vector.load %arg7[%c1_28, %c0_29, %c0_30] : memref<2x8x56xf32, #tpu.memory_space<vmem>>, vector<1x8x56xf32>
      %45 = vector.shape_cast %44 : vector<1x8x56xf32> to vector<8x56xf32>
      %46 = vector.shape_cast %45 : vector<8x56xf32> to vector<1x8x56xf32>
      %cst_31 = arith.constant dense<0.000000e+00> : vector<1xf32>
      %47 = vector.multi_reduction <add>, %46, %cst_31 [1, 2] : vector<1x8x56xf32> to vector<1xf32>
      %48 = vector.shape_cast %47 : vector<1xf32> to vector<1x1x1xf32>
      %49 = vector.extract %48[0, 0, 0] : f32 from vector<1x1x1xf32>
      %50 = tpu.iota {dimensions = array<i32: 1>} : vector<1x8x128xi32>
      %c0_i32_32 = arith.constant 0 : i32
      %51 = vector.broadcast %c0_i32_32 : i32 to vector<1x8x128xi32>
      %52 = arith.cmpi eq, %50, %51 : vector<1x8x128xi32>
      %c1_i32 = arith.constant 1 : i32
      %53 = vector.broadcast %c1_i32 : i32 to vector<1x8x128xi32>
      %54 = arith.cmpi eq, %50, %53 : vector<1x8x128xi32>
      %cst_33 = arith.constant 0.000000e+00 : f32
      %55 = vector.broadcast %49 : f32 to vector<1x8x128xf32>
      %56 = vector.broadcast %cst_33 : f32 to vector<1x8x128xf32>
      %57 = arith.select %54, %55, %56 : vector<1x8x128xi1>, vector<1x8x128xf32>
      %58 = vector.broadcast %43 : f32 to vector<1x8x128xf32>
      %59 = arith.select %52, %58, %57 : vector<1x8x128xi1>, vector<1x8x128xf32>
      %c0_34 = arith.constant 0 : index
      %c0_35 = arith.constant 0 : index
      %c0_36 = arith.constant 0 : index
      %60 = vector.load %arg6[%c0_34, %c0_35, %c0_36] : memref<1x8x128xf32, #tpu.memory_space<vmem>>, vector<1x8x128xf32>
      tpu.vector_store %arg6[%c0_34, %c0_35, %c0_36], %59 {strides = array<i32>} : memref<1x8x128xf32, #tpu.memory_space<vmem>>, vector<1x8x128xf32>,
    } else {
    }
    return
  }
  func.func @transform_0(%arg0: i32, %arg1: i32) -> (i32, i32) {
    %c1_i32 = arith.constant 1 : i32
    %0 = arith.muli %arg0, %c1_i32 : i32
    %1 = arith.addi %0, %arg1 : i32
    %c0_i32 = arith.constant 0 : i32
    %c0_i32_0 = arith.constant 0 : i32
    return %c0_i32, %1 : i32, i32
  }
  func.func @transform_1(%arg0: i32, %arg1: i32) -> (i32, i32) {
    %c1_i32 = arith.constant 1 : i32
    %0 = arith.muli %arg0, %c1_i32 : i32
    %1 = arith.addi %0, %arg1 : i32
    %c0_i32 = arith.constant 0 : i32
    %c0_i32_0 = arith.constant 0 : i32
    return %c0_i32, %1 : i32, i32
  }
  func.func @transform_2(%arg0: i32, %arg1: i32) -> (i32, i32) {
    %c0_i32 = arith.constant 0 : i32
    %c0_i32_0 = arith.constant 0 : i32
    %c0_i32_1 = arith.constant 0 : i32
    return %c0_i32, %c0_i32_0 : i32, i32
  }
  func.func @transform_3(%arg0: i32, %arg1: i32) -> (i32, i32) {
    %c0_i32 = arith.constant 0 : i32
    %c0_i32_0 = arith.constant 0 : i32
    %c0_i32_1 = arith.constant 0 : i32
    return %c0_i32, %c0_i32_0 : i32, i32
  }
  func.func @transform_4(%arg0: i32, %arg1: i32) -> (i32, i32, i32) {
    %c0_i32 = arith.constant 0 : i32
    %c0_i32_0 = arith.constant 0 : i32
    %c0_i32_1 = arith.constant 0 : i32
    return %arg0, %c0_i32, %c0_i32_0 : i32, i32, i32
  }
}

</mosaic_0001>

<llo_original>
// kernel: self_supervise_loss.1
$region0: #{self_supervise_loss.1}
  #allocation0 [shape = 'u32[]', space=smem, size = 0x4, offset = 0x4, fixed_abs, tag = 'smem constant byte address 0x4 - core index']
  #allocation1 [shape = 'u32[144,128]{1,0:T(1,128)}', space=vmem, size = 0x12000, scoped, tag = 'internal scratch']
  #allocation2 [shape = 'f32[2,8,56]{2,1,0:T(8,128)}', space=vmem, size = 0x2000, scoped, tag = 'scratch operand']
  %s0 = inlined_call_operand.vmem [shape: f32[32,56], index: 0, kind: input, shape index: {}]
  %s1 = inlined_call_operand.vmem [shape: f32[8,56], index: 1, kind: input, shape index: {}]
  %s2 = inlined_call_operand.vmem [shape: f32[8,32], index: 2, kind: input, shape index: {}]
  %s3 = inlined_call_operand.vmem [shape: f32[8,1], index: 3, kind: input, shape index: {}]
  %s4 = inlined_call_operand.vmem [shape: f32[1,8,128], index: 4, kind: output, shape index: {}]
  %s5 = sld [smem:[#allocation0]]
  $region34: #{self_supervise_loss.1} parent=0
    _
  %s7 = ssub.s32 1, %s5
  %s8 = scalar_select 0, %s7, %s5
  // Predicated region
  $region2: #{self_supervise_loss.1} parent=0 // pred_check
    _
  $region3: #{self_supervise_loss.1} parent=0 // pred_check_branch
    %10 = sbr.rel (0) target = $region5
  $region4: #{self_supervise_loss.1} parent=0 // pred_region
    %s11 = sadd.s32 0, 0
    %p12 = scmp.lt.s32.totalorder %s11, 0
    %s13 = scalar_select %p12, %s11, 0
    %s14 = smul.addr %s13, 8
    %s15 = scalar_lea.vmem %s0, %s14
    %s16 = sadd.s32 0, 0
  $region5: #{self_supervise_loss.1} parent=0 // pred_fallthru
    _
  // Predicated region
  $region6: #{self_supervise_loss.1} parent=0 // pred_check
    _
  $region7: #{self_supervise_loss.1} parent=0 // pred_check_branch
    %18 = sbr.rel (0) target = $region9
  $region8: #{self_supervise_loss.1} parent=0 // pred_region
    %s19 = sadd.s32 0, 0
    %p20 = scmp.lt.s32.totalorder %s19, 0
    %s21 = scalar_select %p20, %s19, 0
    %s22 = smul.addr %s21, 8
    %s23 = scalar_lea.vmem %s1, %s22
    %s24 = sadd.s32 0, 0
  $region9: #{self_supervise_loss.1} parent=0 // pred_fallthru
    _
  // Predicated region
  $region10: #{self_supervise_loss.1} parent=0 // pred_check
    _
  $region11: #{self_supervise_loss.1} parent=0 // pred_check_branch
    %26 = sbr.rel (0) target = $region13
  $region12: #{self_supervise_loss.1} parent=0 // pred_region
    _
  $region13: #{self_supervise_loss.1} parent=0 // pred_fallthru
    _
  // Predicated region
  $region14: #{self_supervise_loss.1} parent=0 // pred_check
    _
  $region15: #{self_supervise_loss.1} parent=0 // pred_check_branch
    %28 = sbr.rel (0) target = $region17
  $region16: #{self_supervise_loss.1} parent=0 // pred_region
    _
  $region17: #{self_supervise_loss.1} parent=0 // pred_fallthru
    _
  %s29 = sadd.s32 0, 0
  %p30 = scmp.lt.s32.totalorder %s29, 0
  %s31 = scalar_select %p30, %s29, 0
  %s32 = smul.addr %s31, 8
  %s33 = scalar_lea.vmem %s0, %s32
  %s34 = sadd.s32 0, 0
  %p35 = scmp.lt.s32.totalorder %s34, 0
  %s36 = scalar_select %p35, %s34, 0
  %s37 = smul.addr %s36, 8
  %s38 = scalar_lea.vmem %s1, %s37
  %s39 = sadd.s32 0, 0
  %p40 = scmp.lt.s32.totalorder %s39, 0
  %s41 = scalar_select %p40, %s39, 0
  %s42 = smul.addr %s41, 8
  %s43 = scalar_lea.vmem %s0, %s42
  %s44 = sadd.s32 0, 0
  %s45 = sadd.s32 0, 0
  %p46 = scmp.lt.s32.totalorder %s45, 0
  %s47 = scalar_select %p46, %s45, 0
  %s48 = smul.addr %s47, 8
  %s49 = scalar_lea.vmem %s1, %s48
  %s50 = sadd.s32 0, 0
  %p51 = scmp.eq.s32.totalorder 0, 0
  // Predicated region
  $region18: #{self_supervise_loss.1} parent=0 // pred_check
    %p52 = pneg %p51
  $region19: #{self_supervise_loss.1} parent=0 // pred_check_branch
    %54 = sbr.rel (%p52) target = $region21
  $region20: #{self_supervise_loss.1} parent=0 // pred_region
    %vm55 = vcmask 457728
    %56 = vst.msk [vmem:[#allocation2] sm:$0xff] %vm55, 0.0
    %57 = vst.msk [vmem:[#allocation2 + $0x8] sm:$0xff] %vm55, 0.0
  $region21: #{self_supervise_loss.1} parent=0 // pred_fallthru
    _
  %v58 = vld [vmem:[%s43] sm:$0xff]
  %v59 = vld [vmem:[%s43 + $0x8] sm:$0xff]
  %v60 = vld [vmem:[%s43 + $0x10] sm:$0xff]
  %v61 = vld [vmem:[%s43 + $0x18] sm:$0xff]
  %v62 = vld [vmem:[%s49] sm:$0xff]
  %v63 = vld [vmem:[%s2] sm:$0xff]
  %v64 = vld [vmem:[%s3] sm:$0xff]
  %66 = vset.pattern.permute.xlu0 0
  %67 = vperm.xlu0 %66, %v64
  %v68 = vpop.permute.xlu0 %67
  %vm70 = vcmask 261120
  %v72 = vsel %vm70, %v63, 0
  %74 = vmatprep.subr.mxu0 0.0
  %75 = vmatpush1.msra.mxu0 %v58
  %76 = vmatprep.subr.mxu0 0.0
  %77 = vmatpush1.msra.mxu0 %v59
  %78 = vmatprep.subr.mxu0 0.0
  %79 = vmatpush1.msra.mxu0 %v60
  %80 = vmatprep.subr.mxu0 0.0
  %81 = vmatpush1.msra.mxu0 %v61
  %82 = vmatprep.subr.mxu0 0.0
  %83 = vmatpush1.msra.mxu0 0.0
  %84 = vmatprep.subr.mxu0 0.0
  %85 = vmatpush1.msra.mxu0 0.0
  %86 = vmatprep.subr.mxu0 0.0
  %87 = vmatpush1.msra.mxu0 0.0
  %88 = vmatprep.subr.mxu0 0.0
  %89 = vmatpush1.msra.mxu0 0.0
  %90 = vmatprep.subr.mxu0 0.0
  %91 = vmatpush1.msra.mxu0 0.0
  %92 = vmatprep.subr.mxu0 0.0
  %93 = vmatpush1.msra.mxu0 0.0
  %94 = vmatprep.subr.mxu0 0.0
  %95 = vmatpush1.msra.mxu0 0.0
  %96 = vmatprep.subr.mxu0 0.0
  %97 = vmatpush1.msra.mxu0 0.0
  %98 = vmatprep.subr.mxu0 0.0
  %99 = vmatpush1.msra.mxu0 0.0
  %100 = vmatprep.subr.mxu0 0.0
  %101 = vmatpush1.msra.mxu0 0.0
  %102 = vmatprep.subr.mxu0 0.0
  %103 = vmatpush1.msra.mxu0 0.0
  %104 = vmatprep.subr.mxu0 0.0
  %105 = vmatpush1.msra.mxu0 0.0
  %106 = vmatprep.subr.mxu0 0.0
  %107 = vmatpush1.msra.mxu0 0.0
  %108 = vmatprep.subr.mxu0 0.0
  %109 = vmatpush1.msra.mxu0 0.0
  %110 = vmatprep.subr.mxu0 0.0
  %111 = vmatpush1.msra.mxu0 0.0
  %112 = vmatprep.subr.mxu0 0.0
  %113 = vmatpush1.msra.mxu0 0.0
  %114 = vmatprep.subr.mxu0 0.0
  %115 = vmatpush1.msra.mxu0 0.0
  %116 = vmatprep.subr.mxu0 0.0
  %117 = vmatpush1.msra.mxu0 0.0
  %118 = vmatprep.subr.mxu0 0.0
  %119 = vmatpush1.msra.mxu0 0.0
  %120 = vmatprep.subr.mxu0 0.0
  %121 = vmatpush1.msra.mxu0 0.0
  %122 = vmatprep.subr.mxu0 0.0
  %123 = vmatpush1.msra.mxu0 0.0
  %124 = vmatprep.subr.mxu0 0.0
  %125 = vmatpush1.msra.mxu0 0.0
  %126 = vmatprep.subr.mxu0 0.0
  %127 = vmatpush1.msra.mxu0 0.0
  %128 = vmatprep.subr.mxu0 0.0
  %129 = vmatpush1.msra.mxu0 0.0
  %130 = vmatprep.subr.mxu0 0.0
  %131 = vmatpush1.msra.mxu0 0.0
  %132 = vmatprep.subr.mxu0 0.0
  %133 = vmatpush1.msra.mxu0 0.0
  %134 = vmatprep.subr.mxu0 0.0
  %135 = vmatpush1.msra.mxu0 0.0
  %136 = vmatprep.subr.mxu0 0.0
  %137 = vmatpush1.msra.mxu0 0.0
  %138 = vmatprep.mubr.f32.mxu0 0.0
  %139 = vmatmul.mubr.f32.gmra.mrb[0].mxu0 %v72
  %v140 = vpop.f32.mrb[0].mxu0
  %v141 = vadd.f32 %v68, %v140
  %v142 = vpop.f32.mrb[0].mxu0
  %143 = vdwg.mxu0
  %v144 = vmax.f32 %v141, 0.0
  %v145 = vand.u32 2147483647, %v141
  %v146 = vsub.f32 0.0, %v145
  %v147 = vmul.f32 %v146, 1.442695
  %v148 = vpow.pop %v147
  %v149 = vadd.f32 %v148, 1.0
  %v150 = vlog2.pop %v149
  %v151 = vmul.f32 %v150, 0.6931472
  %v152 = vmul.f32 -0.5, %v148
  %v153 = vadd.f32 %v152, 1.0
  %v154 = vmul.f32 %v153, %v148
  %v155 = vand.u32 2147483647, %v148
  %vm156 = vcmp.lt.f32.partialorder %v155, 0.0004427343
  %v157 = vsel %vm156, %v154, %v151
  %v158 = vadd.f32 %v144, %v157
  %v159 = vsub.f32 %v158, %v141
  %v160 = vmul.f32 %v62, %v159
  %v161 = vsub.f32 1.0, %v62
  %v162 = vmul.f32 %v161, %v158
  %v163 = vld [vmem:[#allocation2] sm:$0xff]
  %v164 = vadd.f32 %v163, %v160
  %vm165 = vcmask 457728
  %166 = vst.msk [vmem:[#allocation2] sm:$0xff] %vm165, %v164
  %s167 = scalar_lea.vmem [#allocation2], 8
  %v168 = vld [vmem:[%s167] sm:$0xff]
  %v169 = vadd.f32 %v168, %v162
  %170 = vst.msk [vmem:[%s167] sm:$0xff] %vm165, %v169
  // Predicated region
  $region22: #{self_supervise_loss.1} parent=0 // pred_check
    %p171 = pneg %p51
  $region23: #{self_supervise_loss.1} parent=0 // pred_check_branch
    %173 = sbr.rel (%p171) target = $region25
  $region24: #{self_supervise_loss.1} parent=0 // pred_region
    %v174 = vld [vmem:[#allocation2] sm:$0xff]
    %v175 = vsel %vm165, %v174, 0.0
    %176 = vadd.xlane.f32.xlu0 %v175
    %v177 = vpop.xlane.xlu0 %176
    %v178 = vrot.slane %v177, 4
    %v179 = vadd.f32 %v177, %v178
    %v180 = vrot.slane %v179, 2
    %v181 = vadd.f32 %v179, %v180
    %v182 = vrot.slane %v181, 1
    %v183 = vadd.f32 %v181, %v182
    %s184 = vtos %v183
    %v185 = vld [vmem:[%s167] sm:$0xff]
    %v186 = vsel %vm165, %v185, 0.0
    %187 = vadd.xlane.f32.xlu0 %v186
    %v188 = vpop.xlane.xlu0 %187
    %v189 = vrot.slane %v188, 4
    %v190 = vadd.f32 %v188, %v189
    %v191 = vrot.slane %v190, 2
    %v192 = vadd.f32 %v190, %v191
    %v193 = vrot.slane %v192, 1
    %v194 = vadd.f32 %v192, %v193
    %s195 = vtos %v194
    %v196 = vlaneseq
    %v197 = vshrl.u32 %v196, 7
    %vm198 = vcmp.eq.s32.totalorder %v197, 0
    %vm199 = vcmp.eq.s32.totalorder %v197, 1
    %v200 = vstv %s195
    %v201 = vsel %vm199, %v200, 0.0
    %v202 = vstv %s184
    %v203 = vsel %vm198, %v202, %v201
    %204 = vst [vmem:[%s4] sm:$0xff] %v203
  $region25: #{self_supervise_loss.1} parent=0 // pred_fallthru
    _
  // Predicated region
  $region26: #{self_supervise_loss.1} parent=0 // pred_check
    _
  $region27: #{self_supervise_loss.1} parent=0 // pred_check_branch
    %206 = sbr.rel (0) target = $region29
  $region28: #{self_supervise_loss.1} parent=0 // pred_region
    _
  $region29: #{self_supervise_loss.1} parent=0 // pred_fallthru
    _
  // Predicated region
  $region30: #{self_supervise_loss.1} parent=0 // pred_check
    _
  $region31: #{self_supervise_loss.1} parent=0 // pred_check_branch
    %208 = sbr.rel (0) target = $region33
  $region32: #{self_supervise_loss.1} parent=0 // pred_region
    _
  $region33: #{self_supervise_loss.1} parent=0 // pred_fallthru
    _

</llo_original>
